<compile_context>
chip_gen: v5e
topology: v5e:2x2
jax: 0.10.0
libtpu: 0.0.40
codegen_flags: <defaults>
</compile_context>

<pallas_src>
import math

import jax
import jax.numpy as jnp
from jax.experimental import pallas as pl
from jax.experimental.pallas import tpu as pltpu


# ---------------------------------------------------------------------------
# Kernels
# ---------------------------------------------------------------------------
def _gl_kernel_bias(x_ref, w_ref, b_ref, o_ref, acc_ref):
    # x_ref: (tm, tk) native dtype; w_ref: (tk, c_out) compute dtype;
    # b_ref: (1, c_out) f32; o_ref: (tm, c_out); acc_ref: (tm, c_out) f32.
    @pl.when(pl.program_id(2) == 0)
    def _():
        acc_ref[...] = jnp.zeros_like(acc_ref)

    # In-kernel activation cast (VPU, hidden under the MXU): avoids a
    # wrapper-side cast that would add a full extra HBM pass over x.
    acc_ref[...] += jnp.dot(x_ref[...].astype(w_ref.dtype), w_ref[...],
                            preferred_element_type=jnp.float32)

    @pl.when(pl.program_id(2) == pl.num_programs(2) - 1)
    def _():
        o_ref[...] = (acc_ref[...] + b_ref[...]).astype(o_ref.dtype)


def _gl_kernel_nobias(x_ref, w_ref, o_ref, acc_ref):
    @pl.when(pl.program_id(2) == 0)
    def _():
        acc_ref[...] = jnp.zeros_like(acc_ref)

    acc_ref[...] += jnp.dot(x_ref[...].astype(w_ref.dtype), w_ref[...],
                            preferred_element_type=jnp.float32)

    @pl.when(pl.program_id(2) == pl.num_programs(2) - 1)
    def _():
        o_ref[...] = acc_ref[...].astype(o_ref.dtype)


# ---------------------------------------------------------------------------
# Helpers
# ---------------------------------------------------------------------------
def _round_up(x, m):
    return (x + m - 1) // m * m


def _sublane_multiple(dtype):
    # vreg sublane packing: f32 -> 8 rows, bf16 -> 16, int8/fp8 -> 32.
    return max(8, 32 // jnp.dtype(dtype).itemsize)


def _vmem_capacity_bytes():
    try:
        return int(pltpu.get_tpu_info().vmem_capacity_bytes)
    except Exception:  # pragma: no cover - conservative fallback (v7x per-TC)
        return 64 * 2**20


# ---------------------------------------------------------------------------
# Parameter preparation (cacheable, one-time)
# ---------------------------------------------------------------------------
def prepare_grouped_linear_params(weight, bias, groups, compute_dtype=None):
    """Extract the `groups` diagonal blocks of (W * wmask), pre-transpose to
    (c_in, c_out) matmul layout and cast to the compute dtype.

    Cache the result across forward calls: this is ~3 full HBM passes over
    the weight that should not be paid per step."""
    outp, inp = weight.shape
    G = groups
    assert inp % G == 0 and outp % G == 0
    c_in, c_out = inp // G, outp // G
    if compute_dtype is None:
        compute_dtype = weight.dtype
    gidx = jnp.arange(G)
    w4 = weight.reshape(G, c_out, G, c_in)
    w_blocks = jnp.swapaxes(w4[gidx, :, gidx, :], 1, 2)        # (G, c_in, c_out)
    w_blocks = w_blocks.astype(compute_dtype)
    b_blocks = None
    if bias is not None:
        # Bias add stays f32 regardless of compute dtype.
        b_blocks = bias.astype(jnp.float32).reshape(G, 1, c_out)
    return w_blocks, b_blocks


# ---------------------------------------------------------------------------
# Forward with pre-prepared (cached) parameter blocks
# ---------------------------------------------------------------------------
def grouped_linear_prepared(x, w_blocks, b_blocks=None, *, tm=None,
                            block_k=None, out_dtype=None):
    G, c_in, c_out = w_blocks.shape
    inp, outp = G * c_in, G * c_out
    orig_shape = x.shape
    assert orig_shape[-1] == inp
    x2 = x.reshape(-1, inp)
    B = x2.shape[0]

    if out_dtype is None:
        out_dtype = x.dtype          # pass e.g. bf16 to halve writeback HBM
    compute_dtype = w_blocks.dtype
    x_isz = jnp.dtype(x2.dtype).itemsize
    w_isz = jnp.dtype(compute_dtype).itemsize
    o_isz = jnp.dtype(out_dtype).itemsize

    # ---- generation-aware budgets (v5e/v6e: 128 MiB VMEM, v7x: 64 MiB) ----
    vmem_cap = _vmem_capacity_bytes()
    vmem_budget = min(100 * 2**20, (3 * vmem_cap) // 4)    # ~96 MiB / ~48 MiB

    # ---- batch tile: larger on 128 MiB parts, rounded to dtype sublane ----
    sub = _sublane_multiple(compute_dtype)
    if tm is None:
        tm = 512 if vmem_cap >= 100 * 2**20 else 256
    tm = max(sub, _round_up(min(tm, _round_up(B, sub)), sub))

    # ---- layout choice ------------------------------------------------------
    # Column-slab path: keep x/(y) un-transposed and select the group's
    # column slab via the index_map.  Requires lane-aligned per-group dims.
    column_slab = (c_in % 128 == 0) and (c_out % 128 == 0)

    # ---- K split: stream the contraction dim when the per-group weight
    # block would not fit comfortably in VMEM (matters on v7x's 64 MiB) -----
    if block_k is not None:
        tk = block_k
    elif column_slab:
        tk = c_in
        w_limit = vmem_budget // 4
        while tk % 256 == 0 and tk * c_out * w_isz > w_limit:
            tk //= 2
    else:
        tk = c_in
    assert c_in % tk == 0 and (tk == c_in or tk % 128 == 0)
    n_kt = c_in // tk

    # ---- shrink tm if the pipeline footprint would blow the VMEM budget ---
    def _est(tm_):
        return (2 * tm_ * tk * x_isz + 2 * tk * c_out * w_isz
                + 2 * tm_ * c_out * o_isz + tm_ * c_out * 4 + 2 * c_out * 4)

    while tm > sub and _est(tm) > vmem_budget:
        tm = max(sub, _round_up(tm // 2, sub))

    B_p = _round_up(B, tm)
    n_bt = B_p // tm
    vmem_limit = int(min(vmem_budget, max(16 * 2**20, 2 * _est(tm))))

    # Weight block index is constant across the inner batch-tile loop when
    # there is no K split, so double-buffering it only doubles VMEM residency
    # without hiding any DMA -> single-buffer large blocks (v7x VMEM relief).
    w_pipe = {}
    if n_kt == 1 and tk * c_out * w_isz >= 4 * 2**20:
        w_pipe = dict(pipeline_mode=pl.Buffered(1))

    # Megacore: the outermost *parallel* axis is sharded across TensorCores.
    # If G does not split evenly over 2 cores, shard the batch-tile axis.
    g_sem = "parallel" if G % 2 == 0 else "arbitrary"
    dim_sem = (g_sem, "parallel", "arbitrary")

    has_bias = b_blocks is not None
    kernel = _gl_kernel_bias if has_bias else _gl_kernel_nobias

    if column_slab:
        x_arr = x2 if B_p == B else jnp.pad(x2, ((0, B_p - B), (0, 0)))
        x_spec = pl.BlockSpec((tm, tk), lambda g, i, k: (i, g * n_kt + k))
        out_spec = pl.BlockSpec((tm, c_out), lambda g, i, k: (i, g))
        out_shape = jax.ShapeDtypeStruct((B_p, outp), out_dtype)
    else:
        # Fallback group-major layout (per-group dims become full minor dims).
        x_g = jnp.transpose(x2.reshape(B, G, c_in), (1, 0, 2))   # (G, B, c_in)
        if B_p != B:
            x_g = jnp.pad(x_g, ((0, 0), (0, B_p - B), (0, 0)))
        x_arr = x_g
        x_spec = pl.BlockSpec((None, tm, tk), lambda g, i, k: (g, i, k))
        out_spec = pl.BlockSpec((None, tm, c_out), lambda g, i, k: (g, i, 0))
        out_shape = jax.ShapeDtypeStruct((G, B_p, c_out), out_dtype)

    in_specs = [
        x_spec,
        pl.BlockSpec((None, tk, c_out), lambda g, i, k: (g, k, 0), **w_pipe),
    ]
    operands = [x_arr, w_blocks]
    if has_bias:
        in_specs.append(pl.BlockSpec((None, 1, c_out), lambda g, i, k: (g, 0, 0)))
        operands.append(b_blocks)

    out = pl.pallas_call(
        kernel,
        out_shape=out_shape,
        grid_spec=pltpu.PrefetchScalarGridSpec(
            num_scalar_prefetch=0,
            # Group axis outermost (weight reused over batch tiles); the K
            # reduction axis is innermost ("arbitrary") with an f32 VMEM
            # accumulator initialized/finalized via pl.when.
            grid=(G, n_bt, n_kt),
            in_specs=in_specs,
            out_specs=out_spec,
            scratch_shapes=[pltpu.VMEM((tm, c_out), jnp.float32)],
        ),
        compiler_params=pltpu.CompilerParams(
            dimension_semantics=dim_sem,
            vmem_limit_bytes=vmem_limit),
    )(*operands)

    if column_slab:
        out = out[:B]
    else:
        out = jnp.transpose(out, (1, 0, 2)).reshape(B_p, outp)[:B]
    return out.reshape(orig_shape[:-1] + (outp,))


# ---------------------------------------------------------------------------
# Convenience wrapper (un-cached parameter prep)
# ---------------------------------------------------------------------------
def grouped_linear(x, weight, bias, groups, *, tm=None, block_k=None,
                   compute_dtype=None, out_dtype=None):
    """y = x @ (weight * block_diag_mask).T + bias  (PyTorch GroupedLinear).

    For repeated calls, prepare the parameter blocks once with
    `prepare_grouped_linear_params` and call `grouped_linear_prepared` — the
    per-call weight gather/transpose/cast here is pure overhead otherwise.
    `compute_dtype=jnp.bfloat16` is recommended on v5e/v6e/v7x when ~1e-2
    tolerance is acceptable (f32 accumulation and f32 bias add are kept);
    left opt-in so the default matches the f32 reference tightly.
    """
    w_blocks, b_blocks = prepare_grouped_linear_params(
        weight, bias, groups, compute_dtype=compute_dtype)
    return grouped_linear_prepared(x, w_blocks, b_blocks, tm=tm,
                                   block_k=block_k, out_dtype=out_dtype)


def make_group_mask(inp, outp, groups, dtype=jnp.float32):
    """Reference-only: the block-diagonal mask the PyTorch module builds."""
    c_in = inp // groups
    c_out = outp // groups
    rows = jnp.arange(outp)[:, None] // c_out
    cols = jnp.arange(inp)[None, :] // c_in
    return (rows == cols).astype(dtype)


if __name__ == "__main__":
    key = jax.random.PRNGKey(0)

    def make_params(kw, kb, inp, outp):
        fan_in = inp
        w_bound = math.sqrt(6.0 / ((1.0 + 5.0) * fan_in))  # kaiming_uniform, a=sqrt(5)
        b_bound = 1.0 / math.sqrt(fan_in)
        w = jax.random.uniform(kw, (outp, inp), jnp.float32, -w_bound, w_bound)
        b = jax.random.uniform(kb, (outp,), jnp.float32, -b_bound, b_bound)
        return w, b

    # ---- Test 1: small module-like shapes (c_in = c_out = 16, not lane
    # aligned -> group-major fallback path), extra leading batch dims. ------
    inp1, outp1, g1 = 64, 64, 4
    k1, k2, k3, key = jax.random.split(key, 4)
    w1, b1 = make_params(k1, k2, inp1, outp1)
    x1 = jax.random.normal(k3, (2, 8, inp1), jnp.float32)
    ref1 = (x1.reshape(-1, inp1) @ (w1 * make_group_mask(inp1, outp1, g1)).T
            + b1).reshape(2, 8, outp1)
    out1 = jax.block_until_ready(grouped_linear(x1, w1, b1, g1))
    assert out1.shape == (2, 8, outp1)
    assert jnp.allclose(out1, ref1, atol=1e-2, rtol=1e-2)

    # ---- Test 2: lane-aligned per-group dims -> column-slab path (no
    # activation transposes), forced K split (block_k=128 over c_in=256) to
    # exercise the accumulator init/finalize. -------------------------------
    inp2, outp2, g2 = 512, 256, 2
    k1, k2, k3, key = jax.random.split(key, 4)
    w2, b2 = make_params(k1, k2, inp2, outp2)
    x2 = jax.random.normal(k3, (16, inp2), jnp.float32)
    ref2 = x2 @ (w2 * make_group_mask(inp2, outp2, g2)).T + b2
    out2 = jax.block_until_ready(grouped_linear(x2, w2, b2, g2, block_k=128))
    assert out2.shape == (16, outp2)
    assert jnp.allclose(out2, ref2, atol=1e-2, rtol=1e-2)

    # ---- Test 3: bf16 MXU compute path with cached (prepared) params and
    # the in-kernel f32->bf16 activation cast; looser tolerance. ------------
    w_blk, b_blk = prepare_grouped_linear_params(w2, b2, g2,
                                                 compute_dtype=jnp.bfloat16)
    out3 = jax.block_until_ready(grouped_linear_prepared(x2, w_blk, b_blk))
    assert jnp.allclose(out3, ref2, atol=5e-2, rtol=5e-2)

    # ---- Test 4: bias=None path (no bias DMA / VALU add at all). ----------
    ref4 = (x1.reshape(-1, inp1)
            @ (w1 * make_group_mask(inp1, outp1, g1)).T).reshape(2, 8, outp1)
    out4 = jax.block_until_ready(grouped_linear(x1, w1, None, g1))
    assert jnp.allclose(out4, ref4, atol=1e-2, rtol=1e-2)

    print("KERNEL_OK")
</pallas_src>

<mosaic_0001>
module attributes {stable_mosaic.version = 11 : i64} {
  func.func @_gl_kernel_bias(%arg0: i32, %arg1: i32, %arg2: i32, %arg3: memref<1x16x16xf32, #tpu.memory_space<vmem>>, %arg4: memref<1x16x16xf32, #tpu.memory_space<vmem>>, %arg5: memref<1x1x16xf32, #tpu.memory_space<vmem>>, %arg6: memref<1x16x16xf32, #tpu.memory_space<vmem>>, %arg7: memref<16x16xf32, #tpu.memory_space<vmem>>) attributes {dimension_semantics = [#tpu.dimension_semantics<parallel>, #tpu.dimension_semantics<parallel>, #tpu.dimension_semantics<arbitrary>], iteration_bounds = array<i64: 4, 1, 1>, scalar_prefetch = 0 : i64, scratch_operands = 1 : i64, tpu.core_type = #tpu.core_type<tc>, window_params = [{transform_indices = @transform_0, window_bounds = array<i64: 1, 16, 16>}, {transform_indices = @transform_1, window_bounds = array<i64: 1, 16, 16>}, {transform_indices = @transform_2, window_bounds = array<i64: 1, 1, 16>}, {transform_indices = @transform_3, window_bounds = array<i64: 1, 16, 16>}]} {
    %c0_i32 = arith.constant 0 : i32
    %0 = arith.cmpi eq, %arg2, %c0_i32 : i32
    %1 = arith.extui %0 : i1 to i32
    %c0_i32_0 = arith.constant 0 : i32
    %2 = arith.cmpi ne, %1, %c0_i32_0 : i32
    scf.if %2 {
      %cst_12 = arith.constant 0.000000e+00 : f32
      %14 = vector.broadcast %cst_12 : f32 to vector<16x16xf32>
      %c0_13 = arith.constant 0 : index
      %c0_14 = arith.constant 0 : index
      %15 = vector.load %arg7[%c0_13, %c0_14] : memref<16x16xf32, #tpu.memory_space<vmem>>, vector<16x16xf32>
      tpu.vector_store %arg7[%c0_13, %c0_14], %14 {strides = array<i32>} : memref<16x16xf32, #tpu.memory_space<vmem>>, vector<16x16xf32>,
    } else {
    }
    %c0 = arith.constant 0 : index
    %c0_1 = arith.constant 0 : index
    %3 = vector.load %arg7[%c0, %c0_1] : memref<16x16xf32, #tpu.memory_space<vmem>>, vector<16x16xf32>
    %c0_2 = arith.constant 0 : index
    %c0_3 = arith.constant 0 : index
    %c0_4 = arith.constant 0 : index
    %4 = vector.load %arg3[%c0_2, %c0_3, %c0_4] : memref<1x16x16xf32, #tpu.memory_space<vmem>>, vector<1x16x16xf32>
    %5 = vector.shape_cast %4 : vector<1x16x16xf32> to vector<16x16xf32>
    %c0_5 = arith.constant 0 : index
    %c0_6 = arith.constant 0 : index
    %c0_7 = arith.constant 0 : index
    %6 = vector.load %arg4[%c0_5, %c0_6, %c0_7] : memref<1x16x16xf32, #tpu.memory_space<vmem>>, vector<1x16x16xf32>
    %7 = vector.shape_cast %6 : vector<1x16x16xf32> to vector<16x16xf32>
    %cst = arith.constant dense<0.000000e+00> : vector<16x16xf32>
    %8 = tpu.matmul %5, %7, %cst {dimension_numbers = #tpu.dot_dimension_numbers<[1], [0], [0], [1], [0, 0, 1, 1], [], []>} : vector<16x16xf32>, vector<16x16xf32>, vector<16x16xf32> -> vector<16x16xf32>
    %9 = arith.addf %3, %8 : vector<16x16xf32>
    %c0_8 = arith.constant 0 : index
    %c0_9 = arith.constant 0 : index
    %10 = vector.load %arg7[%c0_8, %c0_9] : memref<16x16xf32, #tpu.memory_space<vmem>>, vector<16x16xf32>
    tpu.vector_store %arg7[%c0_8, %c0_9], %9 {strides = array<i32>} : memref<16x16xf32, #tpu.memory_space<vmem>>, vector<16x16xf32>,
    %c0_i32_10 = arith.constant 0 : i32
    %11 = arith.cmpi eq, %arg2, %c0_i32_10 : i32
    %12 = arith.extui %11 : i1 to i32
    %c0_i32_11 = arith.constant 0 : i32
    %13 = arith.cmpi ne, %12, %c0_i32_11 : i32
    scf.if %13 {
      %c0_12 = arith.constant 0 : index
      %c0_13 = arith.constant 0 : index
      %14 = vector.load %arg7[%c0_12, %c0_13] : memref<16x16xf32, #tpu.memory_space<vmem>>, vector<16x16xf32>
      %c0_14 = arith.constant 0 : index
      %c0_15 = arith.constant 0 : index
      %c0_16 = arith.constant 0 : index
      %15 = vector.load %arg5[%c0_14, %c0_15, %c0_16] : memref<1x1x16xf32, #tpu.memory_space<vmem>>, vector<1x1x16xf32>
      %16 = vector.shape_cast %15 : vector<1x1x16xf32> to vector<1x16xf32>
      %17 = vector.broadcast %16 : vector<1x16xf32> to vector<16x16xf32>
      %18 = arith.addf %14, %17 : vector<16x16xf32>
      %c0_17 = arith.constant 0 : index
      %c0_18 = arith.constant 0 : index
      %c0_19 = arith.constant 0 : index
      %19 = vector.load %arg6[%c0_17, %c0_18, %c0_19] : memref<1x16x16xf32, #tpu.memory_space<vmem>>, vector<1x16x16xf32>
      %20 = vector.shape_cast %19 : vector<1x16x16xf32> to vector<16x16xf32>
      %21 = vector.shape_cast %18 : vector<16x16xf32> to vector<1x16x16xf32>
      tpu.vector_store %arg6[%c0_17, %c0_18, %c0_19], %21 {strides = array<i32>} : memref<1x16x16xf32, #tpu.memory_space<vmem>>, vector<1x16x16xf32>,
    } else {
    }
    return
  }
  func.func @transform_0(%arg0: i32, %arg1: i32, %arg2: i32) -> (i32, i32, i32) {
    %c0_i32 = arith.constant 0 : i32
    return %arg0, %arg1, %arg2 : i32, i32, i32
  }
  func.func @transform_1(%arg0: i32, %arg1: i32, %arg2: i32) -> (i32, i32, i32) {
    %c0_i32 = arith.constant 0 : i32
    %c0_i32_0 = arith.constant 0 : i32
    return %arg0, %arg2, %c0_i32 : i32, i32, i32
  }
  func.func @transform_2(%arg0: i32, %arg1: i32, %arg2: i32) -> (i32, i32, i32) {
    %c0_i32 = arith.constant 0 : i32
    %c0_i32_0 = arith.constant 0 : i32
    %c0_i32_1 = arith.constant 0 : i32
    return %arg0, %c0_i32, %c0_i32_0 : i32, i32, i32
  }
  func.func @transform_3(%arg0: i32, %arg1: i32, %arg2: i32) -> (i32, i32, i32) {
    %c0_i32 = arith.constant 0 : i32
    %c0_i32_0 = arith.constant 0 : i32
    return %arg0, %arg1, %c0_i32 : i32, i32, i32
  }
}

</mosaic_0001>

<llo_original>
// kernel: tpu_custom_call.1
$region0: #{tpu_custom_call.1}
  #allocation0 [shape = 'u32[]', space=smem, size = 0x4, offset = 0x4, fixed_abs, tag = 'smem constant byte address 0x4 - core index']
  #allocation1 [shape = 'u32[72,128]{1,0:T(1,128)}', space=vmem, size = 0x9000, scoped, tag = 'internal scratch']
  #allocation2 [shape = 'f32[16,16]{1,0:T(8,128)}', space=vmem, size = 0x2000, scoped, tag = 'scratch operand']
  %s0 = inlined_call_operand.hbm [shape: f32[4,16,16], index: 0, kind: input, shape index: {}]
  %s1 = inlined_call_operand.hbm [shape: f32[4,16,16], index: 1, kind: input, shape index: {}]
  %s2 = inlined_call_operand.hbm [shape: f32[4,1,16], index: 2, kind: input, shape index: {}]
  %s3 = inlined_call_operand.hbm [shape: f32[4,16,16], index: 3, kind: output, shape index: {}]
  %s4 = sld [smem:[#allocation0]]
  $region65: #{tpu_custom_call.1} parent=0
    _
  %s6 = ssub.s32 1, %s4
  %s7 = scalar_select 0, %s6, %s4
  $region1: #{tpu_custom_call.1} parent=0
    #allocation3 [shape = 'u8[16384]{0}', space=vmem, size = 0x4000, scoped, tag = 'input window, operand 0']
    #allocation4 [shape = 's32[2]{0}', space=sflag, size = 0x8, scoped, tag = 'scoped memory for tpu_custom_call.1']
    #allocation5 [shape = 's32[2]{0}', space=sflag, size = 0x8, scoped, tag = 'scoped memory for tpu_custom_call.1']
    #allocation6 [shape = 'u8[16384]{0}', space=vmem, size = 0x4000, scoped, tag = 'input window, operand 1']
    #allocation7 [shape = 's32[2]{0}', space=sflag, size = 0x8, scoped, tag = 'scoped memory for tpu_custom_call.1']
    #allocation8 [shape = 'u8[1024]{0}', space=vmem, size = 0x400, scoped, tag = 'input window, operand 2']
    #allocation9 [shape = 'u8[16384]{0}', space=vmem, size = 0x4000, scoped, tag = 'output window, operand 0']
    %8 = vsyncpa [#allocation4], 0
    %s9 = scalar_lea.sflag [#allocation4], 1
    %10 = vsyncpa %s9, 0
    %11 = vsyncpa [#allocation7], 0
    %s12 = scalar_lea.sflag [#allocation7], 1
    %13 = vsyncpa %s12, 0
    %14 = vsyncpa [#allocation5], 0
    %s15 = scalar_lea.sflag [#allocation5], 1
    %16 = vsyncpa %s15, 0
    loop: start=0, step=1, limit=6
    $region2: #{tpu_custom_call.1} parent=1 // loop_pre_header
      _
    $region3: #{tpu_custom_call.1} parent=1 // loop_header
      %s18 = sphi 0, %s22
      %p19 = scmp.ge.s32.totalorder %s18, 6
      %s25 = sphi 0, %s44
      %s26 = sphi 0, %s40
      %s27 = sphi 0, %s36
      %s28 = sphi 0, %s25
      %s29 = sphi 0, %s26
      %s30 = sphi 0, %s27
      %s31 = sphi 0, %s28
      %s32 = sphi 0, %s29
      %s33 = sphi 0, %s30
      %s51 = sphi 0, %s53
      %s54 = sphi 0, %s51
      %s55 = sphi 0, %s54
      %s71 = sphi 0, %s55
      %s79 = sphi 0, %s81
      %s82 = sphi 0, %s79
      %s83 = sphi 0, %s82
      %s99 = sphi 0, %s83
      %s105 = sphi 0, %s107
      %s108 = sphi 0, %s105
      %s109 = sphi 0, %s108
      %s125 = sphi 0, %s109
      %s133 = sphi 0, %s135
      %s136 = sphi 0, %s133
      %s137 = sphi 0, %s136
      %s153 = sphi 0, %s137
    $region4: #{tpu_custom_call.1} parent=1 // loop_header_branch
      %21 = sbr.rel (%p19) target = $region8
    $region5: #{tpu_custom_call.1} parent=1 // loop_body
      %s23 = ssub.s32 %s18, 1
      %s24 = ssub.s32 %s18, 2
      %s34 = sadd.s32 1, %s27
      %p35 = scmp.ge.s32.totalorder %s34, 1
      %s36 = scalar_select %p35, 0, %s34
      %s37 = sadd.s32 1, %s26
      %s38 = scalar_select %p35, %s37, %s26
      %p39 = scmp.ge.s32.totalorder %s38, 1
      %s40 = scalar_select %p39, 0, %s38
      %s41 = sadd.s32 1, %s25
      %s42 = scalar_select %p39, %s41, %s25
      %p43 = scmp.ge.s32.totalorder %s42, 4
      %s44 = scalar_select %p43, 0, %s42
      %s45 = ssub.s32 %s25, %s44
      %s46 = ssub.s32 %s26, %s40
      %s47 = sor.u32 %s45, %s46
      %s48 = ssub.s32 %s27, %s36
      %s49 = sor.u32 %s47, %s48
      %p50 = scmp.eq.s32.totalorder %s49, 0
      %s52 = sadd.s32 %s51, 1
      %s53 = scalar_select %p50, %s51, %s52
      %p56 = pneg %p50
      %p57 = scmp.eq.s32.totalorder %s18, 3
      %p58 = por %p56, %p57
      %p59 = scmp.ne.s32.totalorder %s51, %s54
      %p60 = scmp.eq.s32.totalorder %s18, 0
      %p61 = por %p59, %p60
      %p62 = scmp.ne.s32.totalorder %s51, %s54
      %p63 = scmp.eq.s32.totalorder %s23, 3
      %p64 = por %p62, %p63
      %p65 = scmp.ne.s32.totalorder %s54, %s55
      %p66 = scmp.eq.s32.totalorder %s23, 0
      %p67 = por %p65, %p66
      %p68 = scmp.ne.s32.totalorder %s54, %s55
      %p69 = scmp.eq.s32.totalorder %s24, 3
      %p70 = por %p68, %p69
      %p72 = scmp.ne.s32.totalorder %s55, %s71
      %p73 = scmp.eq.s32.totalorder %s24, 0
      %p74 = por %p72, %p73
      %s75 = ssub.s32 %s25, %s44
      %s76 = ssub.s32 %s27, %s36
      %s77 = sor.u32 %s75, %s76
      %p78 = scmp.eq.s32.totalorder %s77, 0
      %s80 = sadd.s32 %s79, 1
      %s81 = scalar_select %p78, %s79, %s80
      %p84 = pneg %p78
      %p85 = scmp.eq.s32.totalorder %s18, 3
      %p86 = por %p84, %p85
      %p87 = scmp.ne.s32.totalorder %s79, %s82
      %p88 = scmp.eq.s32.totalorder %s18, 0
      %p89 = por %p87, %p88
      %p90 = scmp.ne.s32.totalorder %s79, %s82
      %p91 = scmp.eq.s32.totalorder %s23, 3
      %p92 = por %p90, %p91
      %p93 = scmp.ne.s32.totalorder %s82, %s83
      %p94 = scmp.eq.s32.totalorder %s23, 0
      %p95 = por %p93, %p94
      %p96 = scmp.ne.s32.totalorder %s82, %s83
      %p97 = scmp.eq.s32.totalorder %s24, 3
      %p98 = por %p96, %p97
      %p100 = scmp.ne.s32.totalorder %s83, %s99
      %p101 = scmp.eq.s32.totalorder %s24, 0
      %p102 = por %p100, %p101
      %s103 = ssub.s32 %s25, %s44
      %p104 = scmp.eq.s32.totalorder %s103, 0
      %s106 = sadd.s32 %s105, 1
      %s107 = scalar_select %p104, %s105, %s106
      %p110 = pneg %p104
      %p111 = scmp.eq.s32.totalorder %s18, 3
      %p112 = por %p110, %p111
      %p113 = scmp.ne.s32.totalorder %s105, %s108
      %p114 = scmp.eq.s32.totalorder %s18, 0
      %p115 = por %p113, %p114
      %p116 = scmp.ne.s32.totalorder %s105, %s108
      %p117 = scmp.eq.s32.totalorder %s23, 3
      %p118 = por %p116, %p117
      %p119 = scmp.ne.s32.totalorder %s108, %s109
      %p120 = scmp.eq.s32.totalorder %s23, 0
      %p121 = por %p119, %p120
      %p122 = scmp.ne.s32.totalorder %s108, %s109
      %p123 = scmp.eq.s32.totalorder %s24, 3
      %p124 = por %p122, %p123
      %p126 = scmp.ne.s32.totalorder %s109, %s125
      %p127 = scmp.eq.s32.totalorder %s24, 0
      %p128 = por %p126, %p127
      %s129 = ssub.s32 %s25, %s44
      %s130 = ssub.s32 %s26, %s40
      %s131 = sor.u32 %s129, %s130
      %p132 = scmp.eq.s32.totalorder %s131, 0
      %s134 = sadd.s32 %s133, 1
      %s135 = scalar_select %p132, %s133, %s134
      %p138 = pneg %p132
      %p139 = scmp.eq.s32.totalorder %s18, 3
      %p140 = por %p138, %p139
      %p141 = scmp.ne.s32.totalorder %s133, %s136
      %p142 = scmp.eq.s32.totalorder %s18, 0
      %p143 = por %p141, %p142
      %p144 = scmp.ne.s32.totalorder %s133, %s136
      %p145 = scmp.eq.s32.totalorder %s23, 3
      %p146 = por %p144, %p145
      %p147 = scmp.ne.s32.totalorder %s136, %s137
      %p148 = scmp.eq.s32.totalorder %s23, 0
      %p149 = por %p147, %p148
      %p150 = scmp.ne.s32.totalorder %s136, %s137
      %p151 = scmp.eq.s32.totalorder %s24, 3
      %p152 = por %p150, %p151
      %p154 = scmp.ne.s32.totalorder %s137, %s153
      %p155 = scmp.eq.s32.totalorder %s24, 0
      %p156 = por %p154, %p155
      %p157 = scmp.le.s32.totalorder 1, %s18
      %p158 = scmp.lt.s32.totalorder %s18, 5
      %p159 = pnand %p157, %p158
      %p160 = pneg %p159
      // Predicated region
      $region9: #{tpu_custom_call.1} parent=5 // pred_check
        _
      $region10: #{tpu_custom_call.1} parent=5 // pred_check_branch
        %162 = sbr.rel (%p159) target = $region12
      $region11: #{tpu_custom_call.1} parent=5 // pred_region
        %s163 = ssub.s32 %s18, 1
      $region12: #{tpu_custom_call.1} parent=5 // pred_fallthru
        _
      %p164 = scmp.lt.s32.totalorder %s18, 4
      // Predicated region
      $region13: #{tpu_custom_call.1} parent=5 // pred_check
        %p165 = pneg %p164
      $region14: #{tpu_custom_call.1} parent=5 // pred_check_branch
        %167 = sbr.rel (%p165) target = $region16
      $region15: #{tpu_custom_call.1} parent=5 // pred_region
        // Predicated region
        $region17: #{tpu_custom_call.1} parent=15 // pred_check
          %p168 = pneg %p61
        $region18: #{tpu_custom_call.1} parent=15 // pred_check_branch
          %170 = sbr.rel (%p168) target = $region20
        $region19: #{tpu_custom_call.1} parent=15 // pred_region
          %s171 = sand.u32 %s51, 1
          %s172 = scalar_lea.sflag [#allocation4], %s171
          %s173 = sand.u32 %s51, 1
          %s174 = smul.addr %s173, 16
          %s175 = scalar_lea.vmem [#allocation3], %s174
          %s176 = smul.u32 2, %s26
          %178 = vsyncadd %s172, 0
          %s179 = sadd.s32 %s27, %s176
          %s180 = smul.addr %s25, 2
          %s181 = sadd.s32 %s179, %s180
          %s182 = smul.addr %s181, 8
          %s183 = scalar_lea.hbm %s0, %s182
          %s184 = sshll.u32 %s183, 4
          %s185 = int_to_ptr.hbm [resolvable:$true] %s184
          %s186 = sshll.u32 %s175, 4
          %s187 = int_to_ptr.vmem [resolvable:$true] %s186
          %192 = dma.hbm_to_vmem [thread:$0]  %s185, 256, %s187, %s172, 128, 128, 8
        $region20: #{tpu_custom_call.1} parent=15 // pred_fallthru
          _
        // Predicated region
        $region21: #{tpu_custom_call.1} parent=15 // pred_check
          %p193 = pneg %p89
        $region22: #{tpu_custom_call.1} parent=15 // pred_check_branch
          %195 = sbr.rel (%p193) target = $region24
        $region23: #{tpu_custom_call.1} parent=15 // pred_region
          %s196 = sand.u32 %s18, 1
          %s197 = scalar_lea.sflag [#allocation7], %s196
          %s198 = sand.u32 %s79, 1
          %s199 = smul.addr %s198, 16
          %s200 = scalar_lea.vmem [#allocation6], %s199
          %s201 = smul.u32 2, %s27
          %203 = vsyncadd %s197, 0
          %s204 = smul.addr %s25, 2
          %s205 = sadd.s32 %s201, %s204
          %s206 = smul.addr %s205, 8
          %s207 = scalar_lea.hbm %s1, %s206
          %s208 = sshll.u32 %s207, 4
          %s209 = int_to_ptr.hbm [resolvable:$true] %s208
          %s210 = sshll.u32 %s200, 4
          %s211 = int_to_ptr.vmem [resolvable:$true] %s210
          %216 = dma.hbm_to_vmem [thread:$0]  %s209, 256, %s211, %s197, 128, 128, 8
        $region24: #{tpu_custom_call.1} parent=15 // pred_fallthru
          _
        // Predicated region
        $region25: #{tpu_custom_call.1} parent=15 // pred_check
          %p217 = pneg %p115
        $region26: #{tpu_custom_call.1} parent=15 // pred_check_branch
          %219 = sbr.rel (%p217) target = $region28
        $region27: #{tpu_custom_call.1} parent=15 // pred_region
          %s220 = sand.u32 %s18, 1
          %s221 = scalar_lea.sflag [#allocation7], %s220
          %s222 = sand.u32 %s105, 1
          %s223 = scalar_lea.vmem [#allocation8], %s222
          %225 = vsyncadd %s221, 0
          %s226 = scalar_lea.hbm %s2, %s25
          %s228 = sshll.u32 %s226, 4
          %s229 = int_to_ptr.hbm [resolvable:$true] %s228
          %s230 = sshll.u32 %s223, 4
          %s231 = int_to_ptr.vmem [resolvable:$true] %s230
          %233 = dma.hbm_to_vmem [thread:$0]  %s229, 16, %s231, %s221
        $region28: #{tpu_custom_call.1} parent=15 // pred_fallthru
          _
      $region16: #{tpu_custom_call.1} parent=5 // pred_fallthru
        _
      %p234 = scmp.le.s32.totalorder 1, %s18
      %p235 = scmp.lt.s32.totalorder %s18, 5
      %p236 = pnand %p234, %p235
      %p237 = pneg %p236
      // Predicated region
      $region29: #{tpu_custom_call.1} parent=5 // pred_check
        _
      $region30: #{tpu_custom_call.1} parent=5 // pred_check_branch
        %239 = sbr.rel (%p236) target = $region32
      $region31: #{tpu_custom_call.1} parent=5 // pred_region
        %s240 = ssub.s32 %s18, 1
        %s241 = sand.u32 %s54, 1
        %s242 = scalar_lea.sflag [#allocation4], %s241
        %s243 = sand.u32 %s54, 1
        %s244 = smul.addr %s243, 16
        %s245 = scalar_lea.vmem [#allocation3], %s244
        // Predicated region
        $region33: #{tpu_custom_call.1} parent=31 // pred_check
          %p246 = pneg %p67
        $region34: #{tpu_custom_call.1} parent=31 // pred_check_branch
          %248 = sbr.rel (%p246) target = $region36
        $region35: #{tpu_custom_call.1} parent=31 // pred_region
          %250 = dma.done %s242, 256
        $region36: #{tpu_custom_call.1} parent=31 // pred_fallthru
          _
        %s251 = sand.u32 %s23, 1
        %s252 = scalar_lea.sflag [#allocation7], %s251
        %s253 = sand.u32 %s82, 1
        %s254 = smul.addr %s253, 16
        %s255 = scalar_lea.vmem [#allocation6], %s254
        // Predicated region
        $region37: #{tpu_custom_call.1} parent=31 // pred_check
          %p256 = pneg %p95
        $region38: #{tpu_custom_call.1} parent=31 // pred_check_branch
          %258 = sbr.rel (%p256) target = $region40
        $region39: #{tpu_custom_call.1} parent=31 // pred_region
          %260 = dma.done %s252, 256
        $region40: #{tpu_custom_call.1} parent=31 // pred_fallthru
          _
        %s261 = sand.u32 %s23, 1
        %s262 = scalar_lea.sflag [#allocation7], %s261
        %s263 = sand.u32 %s108, 1
        %s264 = scalar_lea.vmem [#allocation8], %s263
        // Predicated region
        $region41: #{tpu_custom_call.1} parent=31 // pred_check
          %p265 = pneg %p121
        $region42: #{tpu_custom_call.1} parent=31 // pred_check_branch
          %267 = sbr.rel (%p265) target = $region44
        $region43: #{tpu_custom_call.1} parent=31 // pred_region
          %269 = dma.done %s262, 16
        $region44: #{tpu_custom_call.1} parent=31 // pred_fallthru
          _
        %s270 = sand.u32 %s54, 1
        %s271 = scalar_lea.sflag [#allocation4], %s270
        %s272 = sand.u32 %s54, 1
        %s273 = smul.addr %s272, 16
        %s274 = scalar_lea.vmem [#allocation3], %s273
        %p275 = pneg %p67
        %p276 = pneg %p64
        %s277 = sand.u32 %s23, 1
        %s278 = scalar_lea.sflag [#allocation7], %s277
        %s279 = sand.u32 %s82, 1
        %s280 = smul.addr %s279, 16
        %s281 = scalar_lea.vmem [#allocation6], %s280
        %p282 = pneg %p95
        %p283 = pneg %p92
        %s284 = sand.u32 %s23, 1
        %s285 = scalar_lea.sflag [#allocation7], %s284
        %s286 = sand.u32 %s108, 1
        %s287 = scalar_lea.vmem [#allocation8], %s286
        %p288 = pneg %p121
        %p289 = pneg %p118
        %p290 = pneg %p149
        %p291 = pneg %p146
        %s292 = sand.u32 %s136, 1
        %s293 = scalar_lea.sflag [#allocation5], %s292
        %s294 = sand.u32 %s136, 1
        %s295 = smul.addr %s294, 16
        %s296 = scalar_lea.vmem [#allocation9], %s295
        %s297 = smul.u32 2, %s29
        %s298 = smul.u32 2, %s30
        %s299 = smul.u32 2, %s29
        %p300 = scmp.eq.s32.totalorder %s30, 0
        // Predicated region
        $region45: #{tpu_custom_call.1} parent=31 // pred_check
          %p301 = pneg %p300
        $region46: #{tpu_custom_call.1} parent=31 // pred_check_branch
          %303 = sbr.rel (%p301) target = $region48
        $region47: #{tpu_custom_call.1} parent=31 // pred_region
          %vm304 = vcmask 130048
          %305 = vst.msk [vmem:[#allocation2] sm:$0xff] %vm304, 0.0
          %306 = vst.msk [vmem:[#allocation2 + $0x8] sm:$0xff] %vm304, 0.0
        $region48: #{tpu_custom_call.1} parent=31 // pred_fallthru
          _
        %v307 = vld [vmem:[#allocation2] sm:$0xff]
        %v308 = vld [vmem:[#allocation2 + $0x8] sm:$0xff]
        %v309 = vld [vmem:[%s245] sm:$0xff]
        %v310 = vld [vmem:[%s245 + $0x8] sm:$0xff]
        %v311 = vld [vmem:[%s255] sm:$0xff]
        %v312 = vld [vmem:[%s255 + $0x8] sm:$0xff]
        %vm313 = vcmask 130048
        %v315 = vsel %vm313, %v309, 0
        %v318 = vsel %vm313, %v310, 0
        %320 = vmatpush.msra.mxu0 0.0
        %321 = vmatpush.msra.mxu0 0.0
        %322 = vmatpush.msra.mxu0 0.0
        %323 = vmatpush.msra.mxu0 0.0
        %324 = vmatpush.msra.mxu0 0.0
        %325 = vmatpush.msra.mxu0 0.0
        %326 = vmatpush.msra.mxu0 0.0
        %327 = vmatpush.msra.mxu0 0.0
        %328 = vmatpush.msra.mxu0 0.0
        %329 = vmatpush.msra.mxu0 0.0
        %330 = vmatpush.msra.mxu0 0.0
        %331 = vmatpush.msra.mxu0 0.0
        %332 = vmatpush.msra.mxu0 0.0
        %333 = vmatpush.msra.mxu0 0.0
        %334 = vmatpush.msra.mxu0 %v312
        %335 = vmatpush.msra.mxu0 %v311
        %336 = vmatmul.f32.gmra.mxu0 %v315
        %v337 = vpop.f32.mrf.mxu0
        %v338 = vadd.f32 0.0, %v337
        %339 = vmatmul.f32.gmra.mxu0 %v318
        %v340 = vpop.f32.mrf.mxu0
        %v341 = vadd.f32 0.0, %v340
        %342 = vdwg.mxu0
        %v343 = vadd.f32 %v307, %v338
        %v344 = vadd.f32 %v308, %v341
        %345 = vst.msk [vmem:[#allocation2] sm:$0xff] %vm313, %v343
        %346 = vst.msk [vmem:[#allocation2 + $0x8] sm:$0xff] %vm313, %v344
        // Predicated region
        $region49: #{tpu_custom_call.1} parent=31 // pred_check
          %p347 = pneg %p300
        $region50: #{tpu_custom_call.1} parent=31 // pred_check_branch
          %349 = sbr.rel (%p347) target = $region52
        $region51: #{tpu_custom_call.1} parent=31 // pred_region
          %v350 = vld [vmem:[#allocation2] sm:$0xff]
          %v351 = vld [vmem:[#allocation2 + $0x8] sm:$0xff]
          %v352 = vld [vmem:[%s264] sm:$0x1]
          %v354 = vperm.slane %v352, 0
          %v356 = vadd.f32 %v350, %v354
          %v357 = vadd.f32 %v351, %v354
          %358 = vst.msk [vmem:[%s296] sm:$0xff] %vm313, %v356
          %359 = vst.msk [vmem:[%s296 + $0x8] sm:$0xff] %vm313, %v357
        $region52: #{tpu_custom_call.1} parent=31 // pred_fallthru
          _
        %s360 = sand.u32 %s136, 1
        %s361 = scalar_lea.sflag [#allocation5], %s360
        %s362 = sand.u32 %s136, 1
        %s363 = smul.addr %s362, 16
        %s364 = scalar_lea.vmem [#allocation9], %s363
        // Predicated region
        $region53: #{tpu_custom_call.1} parent=31 // pred_check
          %p365 = pneg %p146
        $region54: #{tpu_custom_call.1} parent=31 // pred_check_branch
          %367 = sbr.rel (%p365) target = $region56
        $region55: #{tpu_custom_call.1} parent=31 // pred_region
          %s368 = smul.u32 2, %s29
          %370 = vsyncadd %s361, 0
          %s371 = smul.addr %s28, 2
          %s372 = sadd.s32 %s368, %s371
          %s373 = smul.addr %s372, 8
          %s374 = scalar_lea.hbm %s3, %s373
          %s375 = sshll.u32 %s364, 4
          %s376 = int_to_ptr.vmem [resolvable:$true] %s375
          %s377 = sshll.u32 %s374, 4
          %s378 = int_to_ptr.hbm [resolvable:$true] %s377
          %383 = dma.vmem_to_hbm [thread:$0]  %s376, 256, %s378, %s361, 128, 128, 8
        $region56: #{tpu_custom_call.1} parent=31 // pred_fallthru
          _
      $region32: #{tpu_custom_call.1} parent=5 // pred_fallthru
        _
      %p384 = scmp.le.s32.totalorder 2, %s18
      // Predicated region
      $region57: #{tpu_custom_call.1} parent=5 // pred_check
        %p385 = pneg %p384
      $region58: #{tpu_custom_call.1} parent=5 // pred_check_branch
        %387 = sbr.rel (%p385) target = $region60
      $region59: #{tpu_custom_call.1} parent=5 // pred_region
        %s388 = ssub.s32 %s18, 2
        // Predicated region
        $region61: #{tpu_custom_call.1} parent=59 // pred_check
          %p389 = pneg %p152
        $region62: #{tpu_custom_call.1} parent=59 // pred_check_branch
          %391 = sbr.rel (%p389) target = $region64
        $region63: #{tpu_custom_call.1} parent=59 // pred_region
          %s392 = sand.u32 %s137, 1
          %s393 = scalar_lea.sflag [#allocation5], %s392
          %s394 = sand.u32 %s137, 1
          %s395 = smul.addr %s394, 16
          %s396 = scalar_lea.vmem [#allocation9], %s395
          %398 = dma.done %s393, 256
        $region64: #{tpu_custom_call.1} parent=59 // pred_fallthru
          _
      $region60: #{tpu_custom_call.1} parent=5 // pred_fallthru
        _
    $region6: #{tpu_custom_call.1} parent=1 // loop_footer
      %s22 = sadd.s32 1, %s18
    $region7: #{tpu_custom_call.1} parent=1 // loop_footer_branch
      %17 = sbr.rel target = $region3
    $region8: #{tpu_custom_call.1} parent=1 // loop_exit
      _
    %399 = vsyncpa [#allocation4], 1
    %s400 = scalar_lea.sflag [#allocation4], 1
    %401 = vsyncpa %s400, 1
    %402 = vsyncpa [#allocation7], 1
    %s403 = scalar_lea.sflag [#allocation7], 1
    %404 = vsyncpa %s403, 1
    %405 = vsyncpa [#allocation5], 1
    %s406 = scalar_lea.sflag [#allocation5], 1
    %407 = vsyncpa %s406, 1

</llo_original>
